<compile_context>
chip_gen: v6e
topology: v6e:2x2x1
jax: 0.10.0
libtpu: 0.0.40
codegen_flags: <defaults>
</compile_context>

<pallas_src>
import functools

import jax
import jax.numpy as jnp
from jax import lax
from jax.experimental import pallas as pl
from jax.experimental.pallas import tpu as pltpu


def _sa_kernel(gamma_ref, x_ref, mt_ref, kb_ref, wv_ref, bv_ref, o_ref,
               m_scr, l_scr, acc_scr, *, tq, tk, num_k, n_valid, n_pad):
    """One (batch, query-tile) grid step.

    Layout: channels on sublanes, spatial positions on lanes.
      gamma_ref : (1, 1)        f32  SMEM scalar
      x_ref     : (1, C, Npad)  f32  whole padded x slab (VMEM-resident across qi)
      mt_ref    : (C, C)        cdt  Wk^T Wq (folded q/k projections)
      kb_ref    : (C, 1)        f32  Wk^T bq
      wv_ref    : (C, C)        cdt  value projection
      bv_ref    : (C, 1)        f32  value bias
      o_ref     : (1, C, TQ)    f32
    Scratch (per invocation):
      m_scr, l_scr : (1, TQ) f32   online-softmax running max / sum
      acc_scr      : (C, TQ) f32   unnormalized output accumulator
    """
    qi = pl.program_id(1)
    cdt = mt_ref.dtype                       # MXU/exp compute dtype (bf16 or f32)

    q_start = pl.multiple_of(qi * tq, tq)
    xq = x_ref[0, :, pl.ds(q_start, tq)]                                  # (C, TQ) f32

    # y_i = Wk^T (Wq x_i + bq): folded query/key projection (contracts over C).
    y = (jnp.dot(mt_ref[...], xq.astype(cdt), preferred_element_type=jnp.float32)
         + kb_ref[...]).astype(cdt)                                       # (C, TQ)

    # Hoist loop-invariant weight loads out of the KV loop.
    wv = wv_ref[...]                                                      # (C, C) cdt
    bv = bv_ref[...]                                                      # (C, 1) f32

    m_scr[...] = jnp.full(m_scr.shape, -jnp.inf, dtype=m_scr.dtype)
    l_scr[...] = jnp.zeros(l_scr.shape, dtype=l_scr.dtype)
    acc_scr[...] = jnp.zeros(acc_scr.shape, dtype=acc_scr.dtype)

    def kv_step(kvi, carry):
        kv_start = pl.multiple_of(kvi * tk, tk)
        xk = x_ref[0, :, pl.ds(kv_start, tk)].astype(cdt)                 # (C, TK)

        # value tile: v[:, j] = Wv x_j + bv
        # (recomputed per KV tile; at small C this is noise next to the NxN work.
        #  For C >= ~128 precompute V once per batch instead.)
        v = jnp.dot(wv, xk, preferred_element_type=jnp.float32) + bv      # (C, TK)

        # transposed energy tile: e_t[j, i] = x_j . y_i = (Wq x_i + bq).(Wk x_j)
        # (j-constant bk terms cancel exactly in the row softmax -> dropped.)
        e_t = lax.dot_general(xk, y, (((0,), (0,)), ((), ())),
                              preferred_element_type=jnp.float32)         # (TK, TQ)
        if n_pad != n_valid:
            kv_idx = kv_start + lax.broadcasted_iota(jnp.int32, (tk, 1), 0)
            e_t = jnp.where(kv_idx < n_valid, e_t, -1e30)  # mask padded KV columns

        # online softmax over the KV (sublane) axis
        m_prev = m_scr[...]
        m_new = jnp.maximum(m_prev, jnp.max(e_t, axis=0, keepdims=True))  # (1, TQ)
        alpha = jnp.exp(m_prev - m_new)
        p = jnp.exp((e_t - m_new).astype(cdt))          # big exp in cdt (bf16 EUP on v6e/v7x)
        l_scr[...] = alpha * l_scr[...] + jnp.sum(p, axis=0, keepdims=True,
                                                  dtype=jnp.float32)
        acc_scr[...] = alpha * acc_scr[...] + jnp.dot(
            v.astype(cdt), p, preferred_element_type=jnp.float32)
        m_scr[...] = m_new
        return carry

    lax.fori_loop(0, num_k, kv_step, 0)

    # Exact normalization: true divide on the tiny (1, TQ) row-sum, then scale.
    inv_l = 1.0 / l_scr[...]
    out = gamma_ref[0, 0] * (acc_scr[...] * inv_l) + xq
    o_ref[0] = out.astype(o_ref.dtype)


def _default_compute_dtype():
    # bf16 MXU/EUP operands pay off on v6e/v7x; v5e has no bf16 VPU/EUP, so
    # default to f32 there (small-C matmuls are nowhere near MXU-bound anyway).
    try:
        kind = jax.devices()[0].device_kind.lower()
    except Exception:
        return jnp.bfloat16
    if "v5 lite" in kind or "v5e" in kind or "v5lite" in kind:
        return jnp.float32
    return jnp.bfloat16


def sa_block(x_nchw, params, *, tq=None, tk=None, compute_dtype=None):
    """x_nchw: (B, C, H, W) float32. Returns (B, C, H, W) float32."""
    B, C, H, W = x_nchw.shape
    assert C % 8 == 0, "in_dim must be a multiple of 8 (module uses in_dim // 8 query channels)"
    N = H * W
    n_pad = ((N + 127) // 128) * 128          # lane-dense padded spatial extent
    if compute_dtype is None:
        compute_dtype = _default_compute_dtype()

    # Channels-first internal layout: pure reshape (+ zero-pad), no HBM transposes.
    x_flat = x_nchw.reshape(B, C, N).astype(jnp.float32)
    if n_pad != N:
        x_flat = jnp.pad(x_flat, ((0, 0), (0, 0), (0, n_pad - N)))

    # Moderate tiles keep the f32 (TK, TQ) e_t / p intermediates <= 256 KiB.
    tq = (256 if n_pad % 256 == 0 else 128) if tq is None else tq
    tk = 128 if tk is None else tk
    assert n_pad % tq == 0 and n_pad % tk == 0
    num_q, num_k = n_pad // tq, n_pad // tk

    wq, wk, wv = params["wq"], params["wk"], params["wv"]
    mt = (wk.T @ wq).astype(compute_dtype)                               # (C, C)
    kbias = (wk.T @ params["bq"]).reshape(C, 1).astype(jnp.float32)      # (C, 1)
    wv_c = wv.astype(compute_dtype)                                      # (C, C)
    bv_c = params["bv"].reshape(C, 1).astype(jnp.float32)                # (C, 1)
    gamma = params["gamma"].reshape(1, 1).astype(jnp.float32)

    kernel = functools.partial(_sa_kernel, tq=tq, tk=tk, num_k=num_k,
                               n_valid=N, n_pad=n_pad)

    const2 = lambda b, qi: (0, 0)
    cost = pl.CostEstimate(
        flops=int(B * (4 * C * n_pad * n_pad + 2 * C * C * n_pad * (1 + num_q))),
        transcendentals=int(B * n_pad * n_pad),
        bytes_accessed=int(8 * B * C * n_pad + 4 * (2 * C * C + 2 * C)),
    )

    out_flat = pl.pallas_call(
        kernel,
        out_shape=jax.ShapeDtypeStruct((B, C, n_pad), jnp.float32),
        grid_spec=pltpu.PrefetchScalarGridSpec(
            num_scalar_prefetch=0,
            grid=(B, num_q),                          # KV loop is inside the kernel
            in_specs=[
                pl.BlockSpec(memory_space=pltpu.MemorySpace.SMEM),          # gamma
                pl.BlockSpec((1, C, n_pad), lambda b, qi: (b, 0, 0)),        # x slab (resident over qi)
                pl.BlockSpec((C, C), const2),                                # Wk^T Wq
                pl.BlockSpec((C, 1), const2),                                # Wk^T bq
                pl.BlockSpec((C, C), const2),                                # Wv
                pl.BlockSpec((C, 1), const2),                                # bv
            ],
            out_specs=pl.BlockSpec((1, C, tq), lambda b, qi: (b, 0, qi)),
            scratch_shapes=[
                pltpu.VMEM((1, tq), jnp.float32),     # m (running max)
                pltpu.VMEM((1, tq), jnp.float32),     # l (running sum)
                pltpu.VMEM((C, tq), jnp.float32),     # output accumulator
            ],
        ),
        compiler_params=pltpu.CompilerParams(
            dimension_semantics=("parallel", "parallel")),
        cost_estimate=cost,
    )(gamma, x_flat, mt, kbias, wv_c, bv_c)

    if n_pad != N:
        out_flat = out_flat[:, :, :N]
    return out_flat.reshape(B, C, H, W)


def sa_block_reference(x, params):
    """Pure-JAX reference mirroring the PyTorch forward (NCHW)."""
    B, C, H, W = x.shape
    N = H * W
    conv1x1 = lambda x, w, b: jnp.einsum("bchw,oc->bohw", x, w) + b[None, :, None, None]
    q = conv1x1(x, params["wq"], params["bq"]).reshape(B, -1, N).transpose(0, 2, 1)  # (B,N,Cq)
    k = conv1x1(x, params["wk"], params["bk"]).reshape(B, -1, N)                     # (B,Cq,N)
    energy = jnp.einsum("bnc,bcm->bnm", q, k)
    attn = jax.nn.softmax(energy, axis=-1)
    v = conv1x1(x, params["wv"], params["bv"]).reshape(B, -1, N)                     # (B,C,N)
    out = jnp.einsum("bcn,bmn->bcm", v, attn)                                        # bmm(v, attn^T)
    out = out.reshape(B, C, H, W)
    return params["gamma"] * out + x


def init_params(key, C):
    Cq = C // 8
    ks = jax.random.split(key, 6)
    scale = 0.1
    return {
        "wq": scale * jax.random.normal(ks[0], (Cq, C), jnp.float32),
        "bq": scale * jax.random.normal(ks[1], (Cq,), jnp.float32),
        "wk": scale * jax.random.normal(ks[2], (Cq, C), jnp.float32),
        "bk": scale * jax.random.normal(ks[3], (Cq,), jnp.float32),
        "wv": scale * jax.random.normal(ks[4], (C, C), jnp.float32),
        "bv": scale * jax.random.normal(ks[5], (C,), jnp.float32),
        "gamma": jnp.ones((1,), jnp.float32),   # nn.Parameter(torch.ones(1))
    }


if __name__ == "__main__":
    key = jax.random.PRNGKey(0)
    kx, kp, kx2 = jax.random.split(key, 3)

    # ---- N multiple of 128: multiple query and KV tiles, no padding ----------
    B, C, H, W = 2, 32, 16, 16          # N = 256
    x = jax.random.normal(kx, (B, C, H, W), jnp.float32)
    params = init_params(kp, C)
    ref = sa_block_reference(x, params)

    # f32 compute path; tq=tk=128 -> 2 query tiles x 2 KV tiles per batch.
    out_f32 = jax.block_until_ready(
        sa_block(x, params, tq=128, tk=128, compute_dtype=jnp.float32))
    assert out_f32.shape == (B, C, H, W)
    err_f32 = float(jnp.max(jnp.abs(out_f32 - ref)))
    assert jnp.allclose(out_f32, ref, rtol=2e-3, atol=2e-3), \
        f"f32 mismatch: max abs err {err_f32}"

    # Default (chip-dependent) compute dtype + default tiles (tq=256, tk=128).
    out_def = jax.block_until_ready(sa_block(x, params))
    err_def = float(jnp.max(jnp.abs(out_def - ref)))
    assert jnp.allclose(out_def, ref, rtol=5e-2, atol=5e-2), \
        f"default-dtype mismatch: max abs err {err_def}"

    # ---- N NOT a multiple of 128 (real C2FNet-style map): padding + masking --
    H2, W2 = 13, 15                      # N = 195 -> padded to 256; 2nd KV tile half padded
    x2 = jax.random.normal(kx2, (B, C, H2, W2), jnp.float32)
    ref2 = sa_block_reference(x2, params)
    out2 = jax.block_until_ready(sa_block(x2, params, compute_dtype=jnp.float32))
    assert out2.shape == (B, C, H2, W2)
    err_pad = float(jnp.max(jnp.abs(out2 - ref2)))
    assert jnp.allclose(out2, ref2, rtol=2e-3, atol=2e-3), \
        f"padded f32 mismatch: max abs err {err_pad}"

    print("KERNEL_OK")
</pallas_src>

<mosaic_0001>
module attributes {stable_mosaic.version = 11 : i64} {
  func.func @_sa_kernel(%arg0: i32, %arg1: i32, %arg2: memref<1x1xf32, #tpu.memory_space<smem>>, %arg3: memref<1x32x256xf32, #tpu.memory_space<vmem>>, %arg4: memref<32x32xf32, #tpu.memory_space<vmem>>, %arg5: memref<32x1xf32, #tpu.memory_space<vmem>>, %arg6: memref<32x32xf32, #tpu.memory_space<vmem>>, %arg7: memref<32x1xf32, #tpu.memory_space<vmem>>, %arg8: memref<1x32x128xf32, #tpu.memory_space<vmem>>, %arg9: memref<1x128xf32, #tpu.memory_space<vmem>>, %arg10: memref<1x128xf32, #tpu.memory_space<vmem>>, %arg11: memref<32x128xf32, #tpu.memory_space<vmem>>) attributes {dimension_semantics = [#tpu.dimension_semantics<parallel>, #tpu.dimension_semantics<parallel>], iteration_bounds = array<i64: 2, 2>, scalar_prefetch = 0 : i64, scratch_operands = 3 : i64, tpu.core_type = #tpu.core_type<tc>, window_params = [{transform_indices = @transform_0, window_bounds = array<i64: 1, 1>}, {transform_indices = @transform_1, window_bounds = array<i64: 1, 32, 256>}, {pipeline_mode = #tpu.pipeline_mode<synchronous>, transform_indices = @transform_2, window_bounds = array<i64: 32, 32>}, {pipeline_mode = #tpu.pipeline_mode<synchronous>, transform_indices = @transform_3, window_bounds = array<i64: 32, 1>}, {pipeline_mode = #tpu.pipeline_mode<synchronous>, transform_indices = @transform_4, window_bounds = array<i64: 32, 32>}, {pipeline_mode = #tpu.pipeline_mode<synchronous>, transform_indices = @transform_5, window_bounds = array<i64: 32, 1>}, {transform_indices = @transform_6, window_bounds = array<i64: 1, 32, 128>}]} {
    %c128_i32 = arith.constant 128 : i32
    %0 = arith.muli %arg1, %c128_i32 : i32
    %1 = tpu.assume_multiple %0, 128 : i32
    %c0 = arith.constant 0 : index
    %c0_0 = arith.constant 0 : index
    %2 = arith.index_cast %1 : i32 to index
    %3 = vector.load %arg3[%c0, %c0_0, %2] : memref<1x32x256xf32, #tpu.memory_space<vmem>>, vector<1x32x128xf32>
    %4 = vector.shape_cast %3 : vector<1x32x128xf32> to vector<32x128xf32>
    %c0_1 = arith.constant 0 : index
    %c0_2 = arith.constant 0 : index
    %5 = vector.load %arg4[%c0_1, %c0_2] : memref<32x32xf32, #tpu.memory_space<vmem>>, vector<32x32xf32>
    %cst = arith.constant dense<0.000000e+00> : vector<32x128xf32>
    %6 = tpu.matmul %5, %4, %cst {dimension_numbers = #tpu.dot_dimension_numbers<[1], [0], [0], [1], [0, 0, 1, 1], [], []>} : vector<32x32xf32>, vector<32x128xf32>, vector<32x128xf32> -> vector<32x128xf32>
    %c0_3 = arith.constant 0 : index
    %c0_4 = arith.constant 0 : index
    %7 = vector.load %arg5[%c0_3, %c0_4] : memref<32x1xf32, #tpu.memory_space<vmem>>, vector<32x1xf32>
    %8 = vector.broadcast %7 : vector<32x1xf32> to vector<32x128xf32>
    %9 = arith.addf %6, %8 : vector<32x128xf32>
    %c0_5 = arith.constant 0 : index
    %c0_6 = arith.constant 0 : index
    %10 = vector.load %arg6[%c0_5, %c0_6] : memref<32x32xf32, #tpu.memory_space<vmem>>, vector<32x32xf32>
    %c0_7 = arith.constant 0 : index
    %c0_8 = arith.constant 0 : index
    %11 = vector.load %arg7[%c0_7, %c0_8] : memref<32x1xf32, #tpu.memory_space<vmem>>, vector<32x1xf32>
    %cst_9 = arith.constant 0xFF800000 : f32
    %12 = vector.broadcast %cst_9 : f32 to vector<1x128xf32>
    %c0_10 = arith.constant 0 : index
    %c0_11 = arith.constant 0 : index
    %13 = vector.load %arg9[%c0_10, %c0_11] : memref<1x128xf32, #tpu.memory_space<vmem>>, vector<1x128xf32>
    tpu.vector_store %arg9[%c0_10, %c0_11], %12 {strides = array<i32>} : memref<1x128xf32, #tpu.memory_space<vmem>>, vector<1x128xf32>,
    %cst_12 = arith.constant 0.000000e+00 : f32
    %14 = vector.broadcast %cst_12 : f32 to vector<1x128xf32>
    %c0_13 = arith.constant 0 : index
    %c0_14 = arith.constant 0 : index
    %15 = vector.load %arg10[%c0_13, %c0_14] : memref<1x128xf32, #tpu.memory_space<vmem>>, vector<1x128xf32>
    tpu.vector_store %arg10[%c0_13, %c0_14], %14 {strides = array<i32>} : memref<1x128xf32, #tpu.memory_space<vmem>>, vector<1x128xf32>,
    %cst_15 = arith.constant 0.000000e+00 : f32
    %16 = vector.broadcast %cst_15 : f32 to vector<32x128xf32>
    %c0_16 = arith.constant 0 : index
    %c0_17 = arith.constant 0 : index
    %17 = vector.load %arg11[%c0_16, %c0_17] : memref<32x128xf32, #tpu.memory_space<vmem>>, vector<32x128xf32>
    tpu.vector_store %arg11[%c0_16, %c0_17], %16 {strides = array<i32>} : memref<32x128xf32, #tpu.memory_space<vmem>>, vector<32x128xf32>,
    %c0_i32 = arith.constant 0 : i32
    %c2_i32 = arith.constant 2 : i32
    %18 = arith.addi %c0_i32, %c2_i32 : i32
    %c1_i32 = arith.constant 1 : i32
    scf.for %arg12 = %c0_i32 to %18 step %c1_i32  : i32 {
      %c128_i32_29 = arith.constant 128 : i32
      %32 = arith.muli %arg12, %c128_i32_29 : i32
      %33 = tpu.assume_multiple %32, 128 : i32
      %c0_30 = arith.constant 0 : index
      %c0_31 = arith.constant 0 : index
      %34 = arith.index_cast %33 : i32 to index
      %35 = vector.load %arg3[%c0_30, %c0_31, %34] : memref<1x32x256xf32, #tpu.memory_space<vmem>>, vector<1x32x128xf32>
      %36 = vector.shape_cast %35 : vector<1x32x128xf32> to vector<32x128xf32>
      %cst_32 = arith.constant dense<0.000000e+00> : vector<32x128xf32>
      %37 = tpu.matmul %10, %36, %cst_32 {dimension_numbers = #tpu.dot_dimension_numbers<[1], [0], [0], [1], [0, 0, 1, 1], [], []>} : vector<32x32xf32>, vector<32x128xf32>, vector<32x128xf32> -> vector<32x128xf32>
      %38 = vector.broadcast %11 : vector<32x1xf32> to vector<32x128xf32>
      %39 = arith.addf %37, %38 : vector<32x128xf32>
      %cst_33 = arith.constant dense<0.000000e+00> : vector<128x128xf32>
      %40 = tpu.matmul %36, %9, %cst_33 {dimension_numbers = #tpu.dot_dimension_numbers<[0], [0], [1], [1], [0, 1, 1, 1], [], []>} : vector<32x128xf32>, vector<32x128xf32>, vector<128x128xf32> -> vector<128x128xf32>
      %c0_34 = arith.constant 0 : index
      %c0_35 = arith.constant 0 : index
      %41 = vector.load %arg9[%c0_34, %c0_35] : memref<1x128xf32, #tpu.memory_space<vmem>>, vector<1x128xf32>
      %cst_36 = arith.constant dense<0xFF800000> : vector<128xf32>
      %42 = vector.multi_reduction <maximumf>, %40, %cst_36 [0] : vector<128x128xf32> to vector<128xf32>
      %43 = vector.shape_cast %42 : vector<128xf32> to vector<1x128xf32>
      %44 = arith.maximumf %41, %43 : vector<1x128xf32>
      %45 = arith.subf %41, %44 : vector<1x128xf32>
      %46 = math.exp %45 : vector<1x128xf32>
      %47 = vector.broadcast %44 : vector<1x128xf32> to vector<128x128xf32>
      %48 = arith.subf %40, %47 : vector<128x128xf32>
      %49 = math.exp %48 : vector<128x128xf32>
      %c0_37 = arith.constant 0 : index
      %c0_38 = arith.constant 0 : index
      %50 = vector.load %arg10[%c0_37, %c0_38] : memref<1x128xf32, #tpu.memory_space<vmem>>, vector<1x128xf32>
      %51 = arith.mulf %46, %50 : vector<1x128xf32>
      %cst_39 = arith.constant dense<0.000000e+00> : vector<128xf32>
      %52 = vector.multi_reduction <add>, %49, %cst_39 [0] : vector<128x128xf32> to vector<128xf32>
      %53 = vector.shape_cast %52 : vector<128xf32> to vector<1x128xf32>
      %54 = arith.addf %51, %53 : vector<1x128xf32>
      %c0_40 = arith.constant 0 : index
      %c0_41 = arith.constant 0 : index
      %55 = vector.load %arg10[%c0_40, %c0_41] : memref<1x128xf32, #tpu.memory_space<vmem>>, vector<1x128xf32>
      tpu.vector_store %arg10[%c0_40, %c0_41], %54 {strides = array<i32>} : memref<1x128xf32, #tpu.memory_space<vmem>>, vector<1x128xf32>,
      %c0_42 = arith.constant 0 : index
      %c0_43 = arith.constant 0 : index
      %56 = vector.load %arg11[%c0_42, %c0_43] : memref<32x128xf32, #tpu.memory_space<vmem>>, vector<32x128xf32>
      %57 = vector.broadcast %46 : vector<1x128xf32> to vector<32x128xf32>
      %58 = arith.mulf %57, %56 : vector<32x128xf32>
      %cst_44 = arith.constant dense<0.000000e+00> : vector<32x128xf32>
      %59 = tpu.matmul %39, %49, %cst_44 {dimension_numbers = #tpu.dot_dimension_numbers<[1], [0], [0], [1], [0, 0, 1, 1], [], []>} : vector<32x128xf32>, vector<128x128xf32>, vector<32x128xf32> -> vector<32x128xf32>
      %60 = arith.addf %58, %59 : vector<32x128xf32>
      %c0_45 = arith.constant 0 : index
      %c0_46 = arith.constant 0 : index
      %61 = vector.load %arg11[%c0_45, %c0_46] : memref<32x128xf32, #tpu.memory_space<vmem>>, vector<32x128xf32>
      tpu.vector_store %arg11[%c0_45, %c0_46], %60 {strides = array<i32>} : memref<32x128xf32, #tpu.memory_space<vmem>>, vector<32x128xf32>,
      %c0_47 = arith.constant 0 : index
      %c0_48 = arith.constant 0 : index
      %62 = vector.load %arg9[%c0_47, %c0_48] : memref<1x128xf32, #tpu.memory_space<vmem>>, vector<1x128xf32>
      tpu.vector_store %arg9[%c0_47, %c0_48], %44 {strides = array<i32>} : memref<1x128xf32, #tpu.memory_space<vmem>>, vector<1x128xf32>,
    }
    %c2_i32_18 = arith.constant 2 : i32
    %c0_19 = arith.constant 0 : index
    %c0_20 = arith.constant 0 : index
    %19 = vector.load %arg10[%c0_19, %c0_20] : memref<1x128xf32, #tpu.memory_space<vmem>>, vector<1x128xf32>
    %cst_21 = arith.constant 1.000000e+00 : f32
    %20 = vector.broadcast %cst_21 : f32 to vector<1x128xf32>
    %21 = arith.divf %20, %19 : vector<1x128xf32>
    %c0_22 = arith.constant 0 : index
    %c0_23 = arith.constant 0 : index
    %22 = memref.load %arg2[%c0_22, %c0_23] : memref<1x1xf32, #tpu.memory_space<smem>>
    %c0_24 = arith.constant 0 : index
    %c0_25 = arith.constant 0 : index
    %23 = vector.load %arg11[%c0_24, %c0_25] : memref<32x128xf32, #tpu.memory_space<vmem>>, vector<32x128xf32>
    %24 = vector.broadcast %21 : vector<1x128xf32> to vector<32x128xf32>
    %25 = arith.mulf %23, %24 : vector<32x128xf32>
    %26 = vector.broadcast %22 : f32 to vector<32x128xf32>
    %27 = arith.mulf %26, %25 : vector<32x128xf32>
    %28 = arith.addf %27, %4 : vector<32x128xf32>
    %c0_26 = arith.constant 0 : index
    %c0_27 = arith.constant 0 : index
    %c0_28 = arith.constant 0 : index
    %29 = vector.load %arg8[%c0_26, %c0_27, %c0_28] : memref<1x32x128xf32, #tpu.memory_space<vmem>>, vector<1x32x128xf32>
    %30 = vector.shape_cast %29 : vector<1x32x128xf32> to vector<32x128xf32>
    %31 = vector.shape_cast %28 : vector<32x128xf32> to vector<1x32x128xf32>
    tpu.vector_store %arg8[%c0_26, %c0_27, %c0_28], %31 {strides = array<i32>} : memref<1x32x128xf32, #tpu.memory_space<vmem>>, vector<1x32x128xf32>,
    return
  }
  func.func @transform_0(%arg0: i32, %arg1: i32) -> (i32, i32) {
    %c0_i32 = arith.constant 0 : i32
    %c0_i32_0 = arith.constant 0 : i32
    %c0_i32_1 = arith.constant 0 : i32
    return %c0_i32, %c0_i32_0 : i32, i32
  }
  func.func @transform_1(%arg0: i32, %arg1: i32) -> (i32, i32, i32) {
    %c0_i32 = arith.constant 0 : i32
    %c0_i32_0 = arith.constant 0 : i32
    %c0_i32_1 = arith.constant 0 : i32
    return %arg0, %c0_i32, %c0_i32_0 : i32, i32, i32
  }
  func.func @transform_2(%arg0: i32, %arg1: i32) -> (i32, i32) {
    %c0_i32 = arith.constant 0 : i32
    %c0_i32_0 = arith.constant 0 : i32
    %c0_i32_1 = arith.constant 0 : i32
    return %c0_i32, %c0_i32_0 : i32, i32
  }
  func.func @transform_3(%arg0: i32, %arg1: i32) -> (i32, i32) {
    %c0_i32 = arith.constant 0 : i32
    %c0_i32_0 = arith.constant 0 : i32
    %c0_i32_1 = arith.constant 0 : i32
    return %c0_i32, %c0_i32_0 : i32, i32
  }
  func.func @transform_4(%arg0: i32, %arg1: i32) -> (i32, i32) {
    %c0_i32 = arith.constant 0 : i32
    %c0_i32_0 = arith.constant 0 : i32
    %c0_i32_1 = arith.constant 0 : i32
    return %c0_i32, %c0_i32_0 : i32, i32
  }
  func.func @transform_5(%arg0: i32, %arg1: i32) -> (i32, i32) {
    %c0_i32 = arith.constant 0 : i32
    %c0_i32_0 = arith.constant 0 : i32
    %c0_i32_1 = arith.constant 0 : i32
    return %c0_i32, %c0_i32_0 : i32, i32
  }
  func.func @transform_6(%arg0: i32, %arg1: i32) -> (i32, i32, i32) {
    %c0_i32 = arith.constant 0 : i32
    %c0_i32_0 = arith.constant 0 : i32
    return %arg0, %c0_i32, %arg1 : i32, i32, i32
  }
}

</mosaic_0001>

<llo_original>
// kernel: tpu_custom_call.1
$region0: #{tpu_custom_call.1}
  #allocation0 [shape = 'u32[]', space=smem, size = 0x4, offset = 0x4, fixed_abs, tag = 'smem constant byte address 0x4 - core index']
  #allocation1 [shape = 'u32[144,128]{1,0:T(1,128)}', space=vmem, size = 0x12000, scoped, tag = 'internal scratch']
  #allocation2 [shape = 'f32[1,128]{1,0:T(1,128)}', space=vmem, size = 0x200, scoped, tag = 'scratch operand']
  #allocation3 [shape = 'f32[1,128]{1,0:T(1,128)}', space=vmem, size = 0x200, scoped, tag = 'scratch operand']
  #allocation4 [shape = 'f32[32,128]{1,0:T(8,128)}', space=vmem, size = 0x4000, scoped, tag = 'scratch operand']
  #allocation5 [shape = 'f32[1,1]{1,0:T(1,128)S(6)}', space=smem, size = 0x200, scoped, tag = 'scoped memory for tpu_custom_call.1']
  %s0 = inlined_call_operand.<no memory space> [shape: f32[1,1], index: 0, kind: input, shape index: {}]
  %s1 = inlined_call_operand.hbm [shape: f32[2,32,256], index: 1, kind: input, shape index: {}]
  %s2 = inlined_call_operand.vmem [shape: f32[32,32], index: 2, kind: input, shape index: {}]
  %s3 = inlined_call_operand.vmem [shape: f32[32,1], index: 3, kind: input, shape index: {}]
  %s4 = inlined_call_operand.vmem [shape: f32[32,32], index: 4, kind: input, shape index: {}]
  %s5 = inlined_call_operand.vmem [shape: f32[32,1], index: 5, kind: input, shape index: {}]
  %s6 = inlined_call_operand.hbm [shape: f32[2,32,256], index: 6, kind: output, shape index: {}]
  %s7 = sld [smem:[#allocation0]]
  $region68: #{tpu_custom_call.1} parent=0
    _
  %s9 = ssub.s32 1, %s7
  %s10 = scalar_select 0, %s9, %s7
  %11 = sst [smem:[#allocation5]] %s0
  $region1: #{tpu_custom_call.1} parent=0
    #allocation6 [shape = 'u8[65536]{0}', space=vmem, size = 0x10000, scoped, tag = 'input window, operand 1']
    #allocation7 [shape = 's32[2]{0}', space=sflag, size = 0x8, scoped, tag = 'scoped memory for tpu_custom_call.1']
    #allocation8 [shape = 's32[2]{0}', space=sflag, size = 0x8, scoped, tag = 'scoped memory for tpu_custom_call.1']
    #allocation9 [shape = 'u8[32768]{0}', space=vmem, size = 0x8000, scoped, tag = 'output window, operand 0']
    %12 = vsyncpa [#allocation7], 0
    %s13 = scalar_lea.sflag [#allocation7], 1
    %14 = vsyncpa %s13, 0
    %15 = vsyncpa [#allocation8], 0
    %s16 = scalar_lea.sflag [#allocation8], 1
    %17 = vsyncpa %s16, 0
    loop: start=0, step=1, limit=6
    $region2: #{tpu_custom_call.1} parent=1 // loop_pre_header
      _
    $region3: #{tpu_custom_call.1} parent=1 // loop_header
      %s19 = sphi 0, %s23
      %p20 = scmp.ge.s32.totalorder %s19, 6
      %s26 = sphi 0, %s38
      %s27 = sphi 0, %s34
      %s28 = sphi 0, %s26
      %s29 = sphi 0, %s27
      %s30 = sphi 0, %s28
      %s31 = sphi 0, %s29
      %s39 = sphi 0, %s39
      %s41 = sphi 0, %s39
      %s42 = sphi 0, %s41
      %s56 = sphi 0, %s42
      %s62 = sphi 0, %s64
      %s65 = sphi 0, %s62
      %s66 = sphi 0, %s65
      %s82 = sphi 0, %s66
      %s86 = sphi 0, %s86
      %s88 = sphi 0, %s86
      %s89 = sphi 0, %s88
      %s103 = sphi 0, %s89
      %s107 = sphi 0, %s107
      %s109 = sphi 0, %s107
      %s110 = sphi 0, %s109
      %s124 = sphi 0, %s110
      %s128 = sphi 0, %s128
      %s130 = sphi 0, %s128
      %s131 = sphi 0, %s130
      %s145 = sphi 0, %s131
      %s149 = sphi 0, %s149
      %s151 = sphi 0, %s149
      %s152 = sphi 0, %s151
      %s166 = sphi 0, %s152
      %s174 = sphi 0, %s176
      %s177 = sphi 0, %s174
      %s178 = sphi 0, %s177
      %s194 = sphi 0, %s178
    $region4: #{tpu_custom_call.1} parent=1 // loop_header_branch
      %22 = sbr.rel (%p20) target = $region8
    $region5: #{tpu_custom_call.1} parent=1 // loop_body
      %s24 = ssub.s32 %s19, 1
      %s25 = ssub.s32 %s19, 2
      %s32 = sadd.s32 1, %s27
      %p33 = scmp.ge.s32.totalorder %s32, 2
      %s34 = scalar_select %p33, 0, %s32
      %s35 = sadd.s32 1, %s26
      %s36 = scalar_select %p33, %s35, %s26
      %p37 = scmp.ge.s32.totalorder %s36, 2
      %s38 = scalar_select %p37, 0, %s36
      %s40 = sadd.s32 %s39, 1
      %p43 = scmp.eq.s32.totalorder %s19, 3
      %p44 = scmp.ne.s32.totalorder %s39, %s41
      %p45 = scmp.eq.s32.totalorder %s19, 0
      %p46 = por %p44, %p45
      %p47 = scmp.ne.s32.totalorder %s39, %s41
      %p48 = scmp.eq.s32.totalorder %s24, 3
      %p49 = por %p47, %p48
      %p50 = scmp.ne.s32.totalorder %s41, %s42
      %p51 = scmp.eq.s32.totalorder %s24, 0
      %p52 = por %p50, %p51
      %p53 = scmp.ne.s32.totalorder %s41, %s42
      %p54 = scmp.eq.s32.totalorder %s25, 3
      %p55 = por %p53, %p54
      %p57 = scmp.ne.s32.totalorder %s42, %s56
      %p58 = scmp.eq.s32.totalorder %s25, 0
      %p59 = por %p57, %p58
      %s60 = ssub.s32 %s26, %s38
      %p61 = scmp.eq.s32.totalorder %s60, 0
      %s63 = sadd.s32 %s62, 1
      %s64 = scalar_select %p61, %s62, %s63
      %p67 = pneg %p61
      %p68 = scmp.eq.s32.totalorder %s19, 3
      %p69 = por %p67, %p68
      %p70 = scmp.ne.s32.totalorder %s62, %s65
      %p71 = scmp.eq.s32.totalorder %s19, 0
      %p72 = por %p70, %p71
      %p73 = scmp.ne.s32.totalorder %s62, %s65
      %p74 = scmp.eq.s32.totalorder %s24, 3
      %p75 = por %p73, %p74
      %p76 = scmp.ne.s32.totalorder %s65, %s66
      %p77 = scmp.eq.s32.totalorder %s24, 0
      %p78 = por %p76, %p77
      %p79 = scmp.ne.s32.totalorder %s65, %s66
      %p80 = scmp.eq.s32.totalorder %s25, 3
      %p81 = por %p79, %p80
      %p83 = scmp.ne.s32.totalorder %s66, %s82
      %p84 = scmp.eq.s32.totalorder %s25, 0
      %p85 = por %p83, %p84
      %s87 = sadd.s32 %s86, 1
      %p90 = scmp.eq.s32.totalorder %s19, 3
      %p91 = scmp.ne.s32.totalorder %s86, %s88
      %p92 = scmp.eq.s32.totalorder %s19, 0
      %p93 = por %p91, %p92
      %p94 = scmp.ne.s32.totalorder %s86, %s88
      %p95 = scmp.eq.s32.totalorder %s24, 3
      %p96 = por %p94, %p95
      %p97 = scmp.ne.s32.totalorder %s88, %s89
      %p98 = scmp.eq.s32.totalorder %s24, 0
      %p99 = por %p97, %p98
      %p100 = scmp.ne.s32.totalorder %s88, %s89
      %p101 = scmp.eq.s32.totalorder %s25, 3
      %p102 = por %p100, %p101
      %p104 = scmp.ne.s32.totalorder %s89, %s103
      %p105 = scmp.eq.s32.totalorder %s25, 0
      %p106 = por %p104, %p105
      %s108 = sadd.s32 %s107, 1
      %p111 = scmp.eq.s32.totalorder %s19, 3
      %p112 = scmp.ne.s32.totalorder %s107, %s109
      %p113 = scmp.eq.s32.totalorder %s19, 0
      %p114 = por %p112, %p113
      %p115 = scmp.ne.s32.totalorder %s107, %s109
      %p116 = scmp.eq.s32.totalorder %s24, 3
      %p117 = por %p115, %p116
      %p118 = scmp.ne.s32.totalorder %s109, %s110
      %p119 = scmp.eq.s32.totalorder %s24, 0
      %p120 = por %p118, %p119
      %p121 = scmp.ne.s32.totalorder %s109, %s110
      %p122 = scmp.eq.s32.totalorder %s25, 3
      %p123 = por %p121, %p122
      %p125 = scmp.ne.s32.totalorder %s110, %s124
      %p126 = scmp.eq.s32.totalorder %s25, 0
      %p127 = por %p125, %p126
      %s129 = sadd.s32 %s128, 1
      %p132 = scmp.eq.s32.totalorder %s19, 3
      %p133 = scmp.ne.s32.totalorder %s128, %s130
      %p134 = scmp.eq.s32.totalorder %s19, 0
      %p135 = por %p133, %p134
      %p136 = scmp.ne.s32.totalorder %s128, %s130
      %p137 = scmp.eq.s32.totalorder %s24, 3
      %p138 = por %p136, %p137
      %p139 = scmp.ne.s32.totalorder %s130, %s131
      %p140 = scmp.eq.s32.totalorder %s24, 0
      %p141 = por %p139, %p140
      %p142 = scmp.ne.s32.totalorder %s130, %s131
      %p143 = scmp.eq.s32.totalorder %s25, 3
      %p144 = por %p142, %p143
      %p146 = scmp.ne.s32.totalorder %s131, %s145
      %p147 = scmp.eq.s32.totalorder %s25, 0
      %p148 = por %p146, %p147
      %s150 = sadd.s32 %s149, 1
      %p153 = scmp.eq.s32.totalorder %s19, 3
      %p154 = scmp.ne.s32.totalorder %s149, %s151
      %p155 = scmp.eq.s32.totalorder %s19, 0
      %p156 = por %p154, %p155
      %p157 = scmp.ne.s32.totalorder %s149, %s151
      %p158 = scmp.eq.s32.totalorder %s24, 3
      %p159 = por %p157, %p158
      %p160 = scmp.ne.s32.totalorder %s151, %s152
      %p161 = scmp.eq.s32.totalorder %s24, 0
      %p162 = por %p160, %p161
      %p163 = scmp.ne.s32.totalorder %s151, %s152
      %p164 = scmp.eq.s32.totalorder %s25, 3
      %p165 = por %p163, %p164
      %p167 = scmp.ne.s32.totalorder %s152, %s166
      %p168 = scmp.eq.s32.totalorder %s25, 0
      %p169 = por %p167, %p168
      %s170 = ssub.s32 %s26, %s38
      %s171 = ssub.s32 %s27, %s34
      %s172 = sor.u32 %s170, %s171
      %p173 = scmp.eq.s32.totalorder %s172, 0
      %s175 = sadd.s32 %s174, 1
      %s176 = scalar_select %p173, %s174, %s175
      %p179 = pneg %p173
      %p180 = scmp.eq.s32.totalorder %s19, 3
      %p181 = por %p179, %p180
      %p182 = scmp.ne.s32.totalorder %s174, %s177
      %p183 = scmp.eq.s32.totalorder %s19, 0
      %p184 = por %p182, %p183
      %p185 = scmp.ne.s32.totalorder %s174, %s177
      %p186 = scmp.eq.s32.totalorder %s24, 3
      %p187 = por %p185, %p186
      %p188 = scmp.ne.s32.totalorder %s177, %s178
      %p189 = scmp.eq.s32.totalorder %s24, 0
      %p190 = por %p188, %p189
      %p191 = scmp.ne.s32.totalorder %s177, %s178
      %p192 = scmp.eq.s32.totalorder %s25, 3
      %p193 = por %p191, %p192
      %p195 = scmp.ne.s32.totalorder %s178, %s194
      %p196 = scmp.eq.s32.totalorder %s25, 0
      %p197 = por %p195, %p196
      %p198 = scmp.le.s32.totalorder 1, %s19
      %p199 = scmp.lt.s32.totalorder %s19, 5
      %p200 = pnand %p198, %p199
      %p201 = pneg %p200
      // Predicated region
      $region9: #{tpu_custom_call.1} parent=5 // pred_check
        _
      $region10: #{tpu_custom_call.1} parent=5 // pred_check_branch
        %203 = sbr.rel (%p200) target = $region12
      $region11: #{tpu_custom_call.1} parent=5 // pred_region
        %s204 = ssub.s32 %s19, 1
        // Predicated region
        $region13: #{tpu_custom_call.1} parent=11 // pred_check
          %p205 = pneg %p52
        $region14: #{tpu_custom_call.1} parent=11 // pred_check_branch
          %207 = sbr.rel (%p205) target = $region16
        $region15: #{tpu_custom_call.1} parent=11 // pred_region
          _
        $region16: #{tpu_custom_call.1} parent=11 // pred_fallthru
          _
        // Predicated region
        $region17: #{tpu_custom_call.1} parent=11 // pred_check
          %p208 = pneg %p99
        $region18: #{tpu_custom_call.1} parent=11 // pred_check_branch
          %210 = sbr.rel (%p208) target = $region20
        $region19: #{tpu_custom_call.1} parent=11 // pred_region
          _
        $region20: #{tpu_custom_call.1} parent=11 // pred_fallthru
          _
        // Predicated region
        $region21: #{tpu_custom_call.1} parent=11 // pred_check
          %p211 = pneg %p120
        $region22: #{tpu_custom_call.1} parent=11 // pred_check_branch
          %213 = sbr.rel (%p211) target = $region24
        $region23: #{tpu_custom_call.1} parent=11 // pred_region
          _
        $region24: #{tpu_custom_call.1} parent=11 // pred_fallthru
          _
        // Predicated region
        $region25: #{tpu_custom_call.1} parent=11 // pred_check
          %p214 = pneg %p141
        $region26: #{tpu_custom_call.1} parent=11 // pred_check_branch
          %216 = sbr.rel (%p214) target = $region28
        $region27: #{tpu_custom_call.1} parent=11 // pred_region
          _
        $region28: #{tpu_custom_call.1} parent=11 // pred_fallthru
          _
        // Predicated region
        $region29: #{tpu_custom_call.1} parent=11 // pred_check
          %p217 = pneg %p162
        $region30: #{tpu_custom_call.1} parent=11 // pred_check_branch
          %219 = sbr.rel (%p217) target = $region32
        $region31: #{tpu_custom_call.1} parent=11 // pred_region
          _
        $region32: #{tpu_custom_call.1} parent=11 // pred_fallthru
          _
      $region12: #{tpu_custom_call.1} parent=5 // pred_fallthru
        _
      %p220 = scmp.lt.s32.totalorder %s19, 4
      // Predicated region
      $region33: #{tpu_custom_call.1} parent=5 // pred_check
        %p221 = pneg %p220
      $region34: #{tpu_custom_call.1} parent=5 // pred_check_branch
        %223 = sbr.rel (%p221) target = $region36
      $region35: #{tpu_custom_call.1} parent=5 // pred_region
        // Predicated region
        $region37: #{tpu_custom_call.1} parent=35 // pred_check
          %p224 = pneg %p72
        $region38: #{tpu_custom_call.1} parent=35 // pred_check_branch
          %226 = sbr.rel (%p224) target = $region40
        $region39: #{tpu_custom_call.1} parent=35 // pred_region
          %s227 = sand.u32 %s62, 1
          %s228 = scalar_lea.sflag [#allocation7], %s227
          %s229 = sand.u32 %s62, 1
          %s230 = smul.addr %s229, 64
          %s231 = scalar_lea.vmem [#allocation6], %s230
          %s233 = ssub.s32 1024, 1024
          %234 = vsyncadd %s228, %s233
          %s235 = smul.addr %s26, 8
          %s236 = smul.addr %s235, 128
          %s237 = scalar_lea.hbm %s1, %s236
          %s238 = sshll.u32 %s231, 4
          %s239 = int_to_ptr.vmem [resolvable:$true] %s238
          %244 = dma.hbm_to_vmem [thread:$0]  %s237, 1024, %s239, %s228, 256, 256, 16
        $region40: #{tpu_custom_call.1} parent=35 // pred_fallthru
          _
      $region36: #{tpu_custom_call.1} parent=5 // pred_fallthru
        _
      %p245 = scmp.le.s32.totalorder 1, %s19
      %p246 = scmp.lt.s32.totalorder %s19, 5
      %p247 = pnand %p245, %p246
      %p248 = pneg %p247
      // Predicated region
      $region41: #{tpu_custom_call.1} parent=5 // pred_check
        _
      $region42: #{tpu_custom_call.1} parent=5 // pred_check_branch
        %250 = sbr.rel (%p247) target = $region44
      $region43: #{tpu_custom_call.1} parent=5 // pred_region
        %s251 = ssub.s32 %s19, 1
        %s252 = sand.u32 %s65, 1
        %s253 = scalar_lea.sflag [#allocation7], %s252
        %s254 = sand.u32 %s65, 1
        %s255 = smul.addr %s254, 64
        %s256 = scalar_lea.vmem [#allocation6], %s255
        // Predicated region
        $region45: #{tpu_custom_call.1} parent=43 // pred_check
          %p257 = pneg %p78
        $region46: #{tpu_custom_call.1} parent=43 // pred_check_branch
          %259 = sbr.rel (%p257) target = $region48
        $region47: #{tpu_custom_call.1} parent=43 // pred_region
          %260 = dma.done %s253, 1024
        $region48: #{tpu_custom_call.1} parent=43 // pred_fallthru
          _
        %p261 = pneg %p52
        %p262 = pneg %p49
        %s263 = sand.u32 %s65, 1
        %s264 = scalar_lea.sflag [#allocation7], %s263
        %s265 = sand.u32 %s65, 1
        %s266 = smul.addr %s265, 64
        %s267 = scalar_lea.vmem [#allocation6], %s266
        %p268 = pneg %p78
        %p269 = pneg %p75
        %p270 = pneg %p99
        %p271 = pneg %p96
        %p272 = pneg %p120
        %p273 = pneg %p117
        %p274 = pneg %p141
        %p275 = pneg %p138
        %p276 = pneg %p162
        %p277 = pneg %p159
        %p278 = pneg %p190
        %p279 = pneg %p187
        %s280 = sand.u32 %s177, 1
        %s281 = scalar_lea.sflag [#allocation8], %s280
        %s282 = sand.u32 %s177, 1
        %s283 = smul.addr %s282, 32
        %s284 = scalar_lea.vmem [#allocation9], %s283
        %s285 = smul.u32 %s29, 128
        %s286 = sshra.s32 %s285, 7
        %s287 = sand.u32 %s285, 127
        %s288 = smul.addr %s286, 8
        %s289 = scalar_lea.vmem %s256, %s288 [#allocation6]
        %v290 = vld [vmem:[%s289] sm:$0xff]
        %v291 = vld [vmem:[%s289 + $0x10] sm:$0xff]
        %v292 = vld [vmem:[%s289 + $0x20] sm:$0xff]
        %v293 = vld [vmem:[%s289 + $0x30] sm:$0xff]
        %v294 = vld [vmem:[%s2] sm:$0xff]
        %v295 = vld [vmem:[%s2 + $0x8] sm:$0xff]
        %v296 = vld [vmem:[%s2 + $0x10] sm:$0xff]
        %v297 = vld [vmem:[%s2 + $0x18] sm:$0xff]
        %v298 = vld [vmem:[%s3] sm:$0xff]
        %v299 = vld [vmem:[%s3 + $0x8] sm:$0xff]
        %v300 = vld [vmem:[%s3 + $0x10] sm:$0xff]
        %v301 = vld [vmem:[%s3 + $0x18] sm:$0xff]
        %303 = vset.pattern.permute.xlu0 0
        %304 = vperm.xlu0 %303, %v298
        %v305 = vpop.permute.xlu0 %304
        %308 = vset.pattern.permute.xlu0 0
        %309 = vperm.xlu0 %308, %v299
        %v310 = vpop.permute.xlu0 %309
        %313 = vset.pattern.permute.xlu0 0
        %314 = vperm.xlu0 %313, %v300
        %v315 = vpop.permute.xlu0 %314
        %318 = vset.pattern.permute.xlu0 0
        %319 = vperm.xlu0 %318, %v301
        %v320 = vpop.permute.xlu0 %319
        %vm322 = vcmask 261120
        %v324 = vsel %vm322, %v294, 0
        %v327 = vsel %vm322, %v295, 0
        %v330 = vsel %vm322, %v296, 0
        %v333 = vsel %vm322, %v297, 0
        %335 = vmatprep.subr.mxu0 0.0
        %336 = vmatpush1.msra.mxu0 0.0
        %337 = vmatprep.subr.mxu0 0.0
        %338 = vmatpush1.msra.mxu0 0.0
        %339 = vmatprep.subr.mxu0 0.0
        %340 = vmatpush1.msra.mxu0 0.0
        %341 = vmatprep.subr.mxu0 0.0
        %342 = vmatpush1.msra.mxu0 0.0
        %343 = vmatprep.subr.mxu0 0.0
        %344 = vmatpush1.msra.mxu0 0.0
        %345 = vmatprep.subr.mxu0 0.0
        %346 = vmatpush1.msra.mxu0 0.0
        %347 = vmatprep.subr.mxu0 0.0
        %348 = vmatpush1.msra.mxu0 0.0
        %349 = vmatprep.subr.mxu0 0.0
        %350 = vmatpush1.msra.mxu0 0.0
        %351 = vmatprep.subr.mxu0 0.0
        %352 = vmatpush1.msra.mxu0 0.0
        %353 = vmatprep.subr.mxu0 0.0
        %354 = vmatpush1.msra.mxu0 0.0
        %355 = vmatprep.subr.mxu0 0.0
        %356 = vmatpush1.msra.mxu0 0.0
        %357 = vmatprep.subr.mxu0 0.0
        %358 = vmatpush1.msra.mxu0 0.0
        %359 = vmatprep.subr.mxu0 0.0
        %360 = vmatpush1.msra.mxu0 %v293
        %361 = vmatprep.subr.mxu0 0.0
        %362 = vmatpush1.msra.mxu0 %v292
        %363 = vmatprep.subr.mxu0 0.0
        %364 = vmatpush1.msra.mxu0 %v291
        %365 = vmatprep.subr.mxu0 0.0
        %366 = vmatpush1.msra.mxu0 %v290
        %367 = vmatprep.subr.mxu0 0.0
        %368 = vmatpush2.msra.mxu0 0.0
        %369 = vmatprep.subr.mxu0 0.0
        %370 = vmatpush2.msra.mxu0 0.0
        %371 = vmatprep.subr.mxu0 0.0
        %372 = vmatpush2.msra.mxu0 0.0
        %373 = vmatprep.subr.mxu0 0.0
        %374 = vmatpush2.msra.mxu0 0.0
        %375 = vmatprep.subr.mxu0 0.0
        %376 = vmatpush2.msra.mxu0 0.0
        %377 = vmatprep.subr.mxu0 0.0
        %378 = vmatpush2.msra.mxu0 0.0
        %379 = vmatprep.subr.mxu0 0.0
        %380 = vmatpush2.msra.mxu0 0.0
        %381 = vmatprep.subr.mxu0 0.0
        %382 = vmatpush2.msra.mxu0 0.0
        %383 = vmatprep.subr.mxu0 0.0
        %384 = vmatpush2.msra.mxu0 0.0
        %385 = vmatprep.subr.mxu0 0.0
        %386 = vmatpush2.msra.mxu0 0.0
        %387 = vmatprep.subr.mxu0 0.0
        %388 = vmatpush2.msra.mxu0 0.0
        %389 = vmatprep.subr.mxu0 0.0
        %390 = vmatpush2.msra.mxu0 0.0
        %391 = vmatprep.subr.mxu0 0.0
        %392 = vmatpush2.msra.mxu0 0.0
        %393 = vmatprep.subr.mxu0 0.0
        %394 = vmatpush2.msra.mxu0 0.0
        %395 = vmatprep.subr.mxu0 0.0
        %396 = vmatpush2.msra.mxu0 0.0
        %397 = vmatprep.subr.mxu0 0.0
        %398 = vmatpush2.msra.mxu0 0.0
        %399 = vmatprep.mubr.f32.mxu0 0.0
        %400 = vmatmul.mubr.f32.gmra.mxu0 %v324
        %v401 = vpop.f32.mrf.mxu0
        %v402 = vadd.f32 %v305, %v401
        %v403 = vpop.f32.mrf.mxu0
        %404 = vmatprep.mubr.f32.mxu0 0.0
        %405 = vmatmul.mubr.f32.gmra.mxu0 %v327
        %v406 = vpop.f32.mrf.mxu0
        %v407 = vadd.f32 %v310, %v406
        %v408 = vpop.f32.mrf.mxu0
        %409 = vmatprep.mubr.f32.mxu0 0.0
        %410 = vmatmul.mubr.f32.gmra.mxu0 %v330
        %v411 = vpop.f32.mrf.mxu0
        %v412 = vadd.f32 %v315, %v411
        %v413 = vpop.f32.mrf.mxu0
        %414 = vmatprep.mubr.f32.mxu0 0.0
        %415 = vmatmul.mubr.f32.gmra.mxu0 %v333
        %v416 = vpop.f32.mrf.mxu0
        %v417 = vadd.f32 %v320, %v416
        %v418 = vpop.f32.mrf.mxu0
        %419 = vdwg.mxu0
        %v420 = vld [vmem:[%s4] sm:$0xff]
        %v421 = vld [vmem:[%s4 + $0x8] sm:$0xff]
        %v422 = vld [vmem:[%s4 + $0x10] sm:$0xff]
        %v423 = vld [vmem:[%s4 + $0x18] sm:$0xff]
        %v424 = vld [vmem:[%s5] sm:$0xff]
        %v425 = vld [vmem:[%s5 + $0x8] sm:$0xff]
        %v426 = vld [vmem:[%s5 + $0x10] sm:$0xff]
        %v427 = vld [vmem:[%s5 + $0x18] sm:$0xff]
        %428 = vst [vmem:[#allocation2] sm:$0x1] -inf
        %429 = vst [vmem:[#allocation3] sm:$0x1] 0.0
        %430 = vst [vmem:[#allocation4] sm:$0xff] 0.0
        %431 = vst [vmem:[#allocation4 + $0x8] sm:$0xff] 0.0
        %432 = vst [vmem:[#allocation4 + $0x10] sm:$0xff] 0.0
        %433 = vst [vmem:[#allocation4 + $0x18] sm:$0xff] 0.0
        loop: start=0, step=1, limit=2
        $region49: #{tpu_custom_call.1} parent=43 // loop_pre_header
          _
        $region50: #{tpu_custom_call.1} parent=43 // loop_header
          %s435 = sphi 0, %s439
          %p436 = scmp.ge.s32.totalorder %s435, 2
        $region51: #{tpu_custom_call.1} parent=43 // loop_header_branch
          %438 = sbr.rel (%p436) target = $region55
        $region52: #{tpu_custom_call.1} parent=43 // loop_body
          %s440 = smul.u32 %s435, 128
          %s441 = sshra.s32 %s440, 7
          %s442 = sand.u32 %s440, 127
          %s443 = smul.addr %s441, 8
          %s444 = scalar_lea.vmem %s256, %s443 [#allocation6]
          %v445 = vld [vmem:[%s444] sm:$0xff]
          %v446 = vld [vmem:[%s444 + $0x10] sm:$0xff]
          %v447 = vld [vmem:[%s444 + $0x20] sm:$0xff]
          %v448 = vld [vmem:[%s444 + $0x30] sm:$0xff]
          %450 = vset.pattern.permute.xlu0 0
          %451 = vperm.xlu0 %450, %v424
          %v452 = vpop.permute.xlu0 %451
          %455 = vset.pattern.permute.xlu0 0
          %456 = vperm.xlu0 %455, %v425
          %v457 = vpop.permute.xlu0 %456
          %460 = vset.pattern.permute.xlu0 0
          %461 = vperm.xlu0 %460, %v426
          %v462 = vpop.permute.xlu0 %461
          %465 = vset.pattern.permute.xlu0 0
          %466 = vperm.xlu0 %465, %v427
          %v467 = vpop.permute.xlu0 %466
          %v470 = vsel %vm322, %v420, 0
          %v473 = vsel %vm322, %v421, 0
          %v476 = vsel %vm322, %v422, 0
          %v479 = vsel %vm322, %v423, 0
          %481 = vmatprep.subr.mxu0 0.0
          %482 = vmatpush1.msra.mxu0 0.0
          %483 = vmatprep.subr.mxu0 0.0
          %484 = vmatpush1.msra.mxu0 0.0
          %485 = vmatprep.subr.mxu0 0.0
          %486 = vmatpush1.msra.mxu0 0.0
          %487 = vmatprep.subr.mxu0 0.0
          %488 = vmatpush1.msra.mxu0 0.0
          %489 = vmatprep.subr.mxu0 0.0
          %490 = vmatpush1.msra.mxu0 0.0
          %491 = vmatprep.subr.mxu0 0.0
          %492 = vmatpush1.msra.mxu0 0.0
          %493 = vmatprep.subr.mxu0 0.0
          %494 = vmatpush1.msra.mxu0 0.0
          %495 = vmatprep.subr.mxu0 0.0
          %496 = vmatpush1.msra.mxu0 0.0
          %497 = vmatprep.subr.mxu0 0.0
          %498 = vmatpush1.msra.mxu0 0.0
          %499 = vmatprep.subr.mxu0 0.0
          %500 = vmatpush1.msra.mxu0 0.0
          %501 = vmatprep.subr.mxu0 0.0
          %502 = vmatpush1.msra.mxu0 0.0
          %503 = vmatprep.subr.mxu0 0.0
          %504 = vmatpush1.msra.mxu0 0.0
          %505 = vmatprep.subr.mxu0 0.0
          %506 = vmatpush1.msra.mxu0 %v448
          %507 = vmatprep.subr.mxu0 0.0
          %508 = vmatpush1.msra.mxu0 %v447
          %509 = vmatprep.subr.mxu0 0.0
          %510 = vmatpush1.msra.mxu0 %v446
          %511 = vmatprep.subr.mxu0 0.0
          %512 = vmatpush1.msra.mxu0 %v445
          %513 = vmatprep.subr.mxu0 0.0
          %514 = vmatpush2.msra.mxu0 0.0
          %515 = vmatprep.subr.mxu0 0.0
          %516 = vmatpush2.msra.mxu0 0.0
          %517 = vmatprep.subr.mxu0 0.0
          %518 = vmatpush2.msra.mxu0 0.0
          %519 = vmatprep.subr.mxu0 0.0
          %520 = vmatpush2.msra.mxu0 0.0
          %521 = vmatprep.subr.mxu0 0.0
          %522 = vmatpush2.msra.mxu0 0.0
          %523 = vmatprep.subr.mxu0 0.0
          %524 = vmatpush2.msra.mxu0 0.0
          %525 = vmatprep.subr.mxu0 0.0
          %526 = vmatpush2.msra.mxu0 0.0
          %527 = vmatprep.subr.mxu0 0.0
          %528 = vmatpush2.msra.mxu0 0.0
          %529 = vmatprep.subr.mxu0 0.0
          %530 = vmatpush2.msra.mxu0 0.0
          %531 = vmatprep.subr.mxu0 0.0
          %532 = vmatpush2.msra.mxu0 0.0
          %533 = vmatprep.subr.mxu0 0.0
          %534 = vmatpush2.msra.mxu0 0.0
          %535 = vmatprep.subr.mxu0 0.0
          %536 = vmatpush2.msra.mxu0 0.0
          %537 = vmatprep.subr.mxu0 0.0
          %538 = vmatpush2.msra.mxu0 0.0
          %539 = vmatprep.subr.mxu0 0.0
          %540 = vmatpush2.msra.mxu0 0.0
          %541 = vmatprep.subr.mxu0 0.0
          %542 = vmatpush2.msra.mxu0 0.0
          %543 = vmatprep.subr.mxu0 0.0
          %544 = vmatpush2.msra.mxu0 0.0
          %545 = vmatprep.mubr.f32.mxu0 0.0
          %546 = vmatmul.mubr.f32.gmra.mxu0 %v470
          %v547 = vpop.f32.mrf.mxu0
          %v548 = vadd.f32 %v452, %v547
          %v549 = vpop.f32.mrf.mxu0
          %550 = vmatprep.mubr.f32.mxu0 0.0
          %551 = vmatmul.mubr.f32.gmra.mxu0 %v473
          %v552 = vpop.f32.mrf.mxu0
          %v553 = vadd.f32 %v457, %v552
          %v554 = vpop.f32.mrf.mxu0
          %555 = vmatprep.mubr.f32.mxu0 0.0
          %556 = vmatmul.mubr.f32.gmra.mxu0 %v476
          %v557 = vpop.f32.mrf.mxu0
          %v558 = vadd.f32 %v462, %v557
          %v559 = vpop.f32.mrf.mxu0
          %560 = vmatprep.mubr.f32.mxu0 0.0
          %561 = vmatmul.mubr.f32.gmra.mxu0 %v479
          %v562 = vpop.f32.mrf.mxu0
          %v563 = vadd.f32 %v467, %v562
          %v564 = vpop.f32.mrf.mxu0
          %565 = vdwg.mxu0
          %566 = vxpose.xlu0.b32.start [1/16] %v445, 128
          %567 = vxpose.xlu0.b32.cont [2/16] %v446, 128
          %568 = vxpose.xlu0.b32.cont [3/16] %v447, 128
          %569 = vxpose.xlu0.b32.cont [4/16] %v448, 128
          %570 = vxpose.xlu0.b32.cont [5/16] 0.0, 128
          %571 = vxpose.xlu0.b32.cont [6/16] 0.0, 128
          %572 = vxpose.xlu0.b32.cont [7/16] 0.0, 128
          %573 = vxpose.xlu0.b32.cont [8/16] 0.0, 128
          %574 = vxpose.xlu0.b32.cont [9/16] 0.0, 128
          %575 = vxpose.xlu0.b32.cont [10/16] 0.0, 128
          %576 = vxpose.xlu0.b32.cont [11/16] 0.0, 128
          %577 = vxpose.xlu0.b32.cont [12/16] 0.0, 128
          %578 = vxpose.xlu0.b32.cont [13/16] 0.0, 128
          %579 = vxpose.xlu0.b32.cont [14/16] 0.0, 128
          %580 = vxpose.xlu0.b32.cont [15/16] 0.0, 128
          %581 = vxpose.xlu0.b32.end [16/16] 0.0, 128
          %v582 = vpop.trf.xlu0
          %v583 = vpop.trf.xlu0
          %v584 = vpop.trf.xlu0
          %v585 = vpop.trf.xlu0
          %v586 = vpop.trf.xlu0
          %v587 = vpop.trf.xlu0
          %v588 = vpop.trf.xlu0
          %v589 = vpop.trf.xlu0
          %v590 = vpop.trf.xlu0
          %v591 = vpop.trf.xlu0
          %v592 = vpop.trf.xlu0
          %v593 = vpop.trf.xlu0
          %v594 = vpop.trf.xlu0
          %v595 = vpop.trf.xlu0
          %v596 = vpop.trf.xlu0
          %v597 = vpop.trf.xlu0
          %v599 = vsel %vm322, %v582, 0
          %v602 = vsel %vm322, %v583, 0
          %v605 = vsel %vm322, %v584, 0
          %v608 = vsel %vm322, %v585, 0
          %v611 = vsel %vm322, %v586, 0
          %v614 = vsel %vm322, %v587, 0
          %v617 = vsel %vm322, %v588, 0
          %v620 = vsel %vm322, %v589, 0
          %v623 = vsel %vm322, %v590, 0
          %v626 = vsel %vm322, %v591, 0
          %v629 = vsel %vm322, %v592, 0
          %v632 = vsel %vm322, %v593, 0
          %v635 = vsel %vm322, %v594, 0
          %v638 = vsel %vm322, %v595, 0
          %v641 = vsel %vm322, %v596, 0
          %v644 = vsel %vm322, %v597, 0
          %646 = vmatprep.subr.mxu0 0.0
          %647 = vmatpush1.msra.mxu0 0.0
          %648 = vmatprep.subr.mxu0 0.0
          %649 = vmatpush1.msra.mxu0 0.0
          %650 = vmatprep.subr.mxu0 0.0
          %651 = vmatpush1.msra.mxu0 0.0
          %652 = vmatprep.subr.mxu0 0.0
          %653 = vmatpush1.msra.mxu0 0.0
          %654 = vmatprep.subr.mxu0 0.0
          %655 = vmatpush1.msra.mxu0 0.0
          %656 = vmatprep.subr.mxu0 0.0
          %657 = vmatpush1.msra.mxu0 0.0
          %658 = vmatprep.subr.mxu0 0.0
          %659 = vmatpush1.msra.mxu0 0.0
          %660 = vmatprep.subr.mxu0 0.0
          %661 = vmatpush1.msra.mxu0 0.0
          %662 = vmatprep.subr.mxu0 0.0
          %663 = vmatpush1.msra.mxu0 0.0
          %664 = vmatprep.subr.mxu0 0.0
          %665 = vmatpush1.msra.mxu0 0.0
          %666 = vmatprep.subr.mxu0 0.0
          %667 = vmatpush1.msra.mxu0 0.0
          %668 = vmatprep.subr.mxu0 0.0
          %669 = vmatpush1.msra.mxu0 0.0
          %670 = vmatprep.subr.mxu0 0.0
          %671 = vmatpush1.msra.mxu0 %v417
          %672 = vmatprep.subr.mxu0 0.0
          %673 = vmatpush1.msra.mxu0 %v412
          %674 = vmatprep.subr.mxu0 0.0
          %675 = vmatpush1.msra.mxu0 %v407
          %676 = vmatprep.subr.mxu0 0.0
          %677 = vmatpush1.msra.mxu0 %v402
          %678 = vmatprep.subr.mxu0 0.0
          %679 = vmatpush2.msra.mxu0 0.0
          %680 = vmatprep.subr.mxu0 0.0
          %681 = vmatpush2.msra.mxu0 0.0
          %682 = vmatprep.subr.mxu0 0.0
          %683 = vmatpush2.msra.mxu0 0.0
          %684 = vmatprep.subr.mxu0 0.0
          %685 = vmatpush2.msra.mxu0 0.0
          %686 = vmatprep.subr.mxu0 0.0
          %687 = vmatpush2.msra.mxu0 0.0
          %688 = vmatprep.subr.mxu0 0.0
          %689 = vmatpush2.msra.mxu0 0.0
          %690 = vmatprep.subr.mxu0 0.0
          %691 = vmatpush2.msra.mxu0 0.0
          %692 = vmatprep.subr.mxu0 0.0
          %693 = vmatpush2.msra.mxu0 0.0
          %694 = vmatprep.subr.mxu0 0.0
          %695 = vmatpush2.msra.mxu0 0.0
          %696 = vmatprep.subr.mxu0 0.0
          %697 = vmatpush2.msra.mxu0 0.0
          %698 = vmatprep.subr.mxu0 0.0
          %699 = vmatpush2.msra.mxu0 0.0
          %700 = vmatprep.subr.mxu0 0.0
          %701 = vmatpush2.msra.mxu0 0.0
          %702 = vmatprep.subr.mxu0 0.0
          %703 = vmatpush2.msra.mxu0 0.0
          %704 = vmatprep.subr.mxu0 0.0
          %705 = vmatpush2.msra.mxu0 0.0
          %706 = vmatprep.subr.mxu0 0.0
          %707 = vmatpush2.msra.mxu0 0.0
          %708 = vmatprep.subr.mxu0 0.0
          %709 = vmatpush2.msra.mxu0 0.0
          %710 = vmatprep.mubr.f32.mxu0 0.0
          %711 = vmatmul.mubr.f32.gmra.mxu0 %v599
          %v712 = vpop.f32.mrf.mxu0
          %v713 = vadd.f32 0.0, %v712
          %v714 = vpop.f32.mrf.mxu0
          %715 = vmatprep.mubr.f32.mxu0 0.0
          %716 = vmatmul.mubr.f32.gmra.mxu0 %v602
          %v717 = vpop.f32.mrf.mxu0
          %v718 = vadd.f32 0.0, %v717
          %v719 = vpop.f32.mrf.mxu0
          %720 = vmatprep.mubr.f32.mxu0 0.0
          %721 = vmatmul.mubr.f32.gmra.mxu0 %v605
          %v722 = vpop.f32.mrf.mxu0
          %v723 = vadd.f32 0.0, %v722
          %v724 = vpop.f32.mrf.mxu0
          %725 = vmatprep.mubr.f32.mxu0 0.0
          %726 = vmatmul.mubr.f32.gmra.mxu0 %v608
          %v727 = vpop.f32.mrf.mxu0
          %v728 = vadd.f32 0.0, %v727
          %v729 = vpop.f32.mrf.mxu0
          %730 = vmatprep.mubr.f32.mxu0 0.0
          %731 = vmatmul.mubr.f32.gmra.mxu0 %v611
          %v732 = vpop.f32.mrf.mxu0
          %v733 = vadd.f32 0.0, %v732
          %v734 = vpop.f32.mrf.mxu0
          %735 = vmatprep.mubr.f32.mxu0 0.0
          %736 = vmatmul.mubr.f32.gmra.mxu0 %v614
          %v737 = vpop.f32.mrf.mxu0
          %v738 = vadd.f32 0.0, %v737
          %v739 = vpop.f32.mrf.mxu0
          %740 = vmatprep.mubr.f32.mxu0 0.0
          %741 = vmatmul.mubr.f32.gmra.mxu0 %v617
          %v742 = vpop.f32.mrf.mxu0
          %v743 = vadd.f32 0.0, %v742
          %v744 = vpop.f32.mrf.mxu0
          %745 = vmatprep.mubr.f32.mxu0 0.0
          %746 = vmatmul.mubr.f32.gmra.mxu0 %v620
          %v747 = vpop.f32.mrf.mxu0
          %v748 = vadd.f32 0.0, %v747
          %v749 = vpop.f32.mrf.mxu0
          %750 = vmatprep.mubr.f32.mxu0 0.0
          %751 = vmatmul.mubr.f32.gmra.mxu0 %v623
          %v752 = vpop.f32.mrf.mxu0
          %v753 = vadd.f32 0.0, %v752
          %v754 = vpop.f32.mrf.mxu0
          %755 = vmatprep.mubr.f32.mxu0 0.0
          %756 = vmatmul.mubr.f32.gmra.mxu0 %v626
          %v757 = vpop.f32.mrf.mxu0
          %v758 = vadd.f32 0.0, %v757
          %v759 = vpop.f32.mrf.mxu0
          %760 = vmatprep.mubr.f32.mxu0 0.0
          %761 = vmatmul.mubr.f32.gmra.mxu0 %v629
          %v762 = vpop.f32.mrf.mxu0
          %v763 = vadd.f32 0.0, %v762
          %v764 = vpop.f32.mrf.mxu0
          %765 = vmatprep.mubr.f32.mxu0 0.0
          %766 = vmatmul.mubr.f32.gmra.mxu0 %v632
          %v767 = vpop.f32.mrf.mxu0
          %v768 = vadd.f32 0.0, %v767
          %v769 = vpop.f32.mrf.mxu0
          %770 = vmatprep.mubr.f32.mxu0 0.0
          %771 = vmatmul.mubr.f32.gmra.mxu0 %v635
          %v772 = vpop.f32.mrf.mxu0
          %v773 = vadd.f32 0.0, %v772
          %v774 = vpop.f32.mrf.mxu0
          %775 = vmatprep.mubr.f32.mxu0 0.0
          %776 = vmatmul.mubr.f32.gmra.mxu0 %v638
          %v777 = vpop.f32.mrf.mxu0
          %v778 = vadd.f32 0.0, %v777
          %v779 = vpop.f32.mrf.mxu0
          %780 = vmatprep.mubr.f32.mxu0 0.0
          %781 = vmatmul.mubr.f32.gmra.mxu0 %v641
          %v782 = vpop.f32.mrf.mxu0
          %v783 = vadd.f32 0.0, %v782
          %v784 = vpop.f32.mrf.mxu0
          %785 = vmatprep.mubr.f32.mxu0 0.0
          %786 = vmatmul.mubr.f32.gmra.mxu0 %v644
          %v787 = vpop.f32.mrf.mxu0
          %v788 = vadd.f32 0.0, %v787
          %v789 = vpop.f32.mrf.mxu0
          %790 = vdwg.mxu0
          %v791 = vld [vmem:[#allocation2] sm:$0x1]
          %v792 = vmax.f32 %v713, %v733
          %v793 = vmax.f32 %v718, %v738
          %v794 = vmax.f32 %v723, %v743
          %v795 = vmax.f32 %v728, %v748
          %v796 = vmax.f32 %v792, %v753
          %v797 = vmax.f32 %v793, %v758
          %v798 = vmax.f32 %v794, %v763
          %v799 = vmax.f32 %v795, %v768
          %v800 = vmax.f32 %v796, %v773
          %v801 = vmax.f32 %v797, %v778
          %v802 = vmax.f32 %v798, %v783
          %v803 = vmax.f32 %v799, %v788
          %v804 = vmax.f32 %v800, %v801
          %v805 = vmax.f32 %v802, %v803
          %v806 = vmax.f32 %v804, %v805
          %v807 = vrot.slane %v806, 4
          %v808 = vmax.f32 %v806, %v807
          %v809 = vrot.slane %v808, 2
          %v810 = vmax.f32 %v808, %v809
          %v811 = vrot.slane %v810, 1
          %v812 = vmax.f32 %v810, %v811
          %v813 = vmax.f32 %v791, %v812
          %v814 = vsub.f32 %v791, %v813
          %v815 = vmul.f32 %v814, 1.442695
          %v816 = vpow.pop %v815
          %v818 = vlaneseq
          %v819 = vshrl.u32 %v818, 7
          %v820 = vsub.s32 0, %v819
          %v821 = vrot.slane %v813, %v820
          %v823 = vsub.f32 %v713, %v821
          %v824 = vsub.f32 %v718, %v821
          %v825 = vsub.f32 %v723, %v821
          %v826 = vsub.f32 %v728, %v821
          %v827 = vsub.f32 %v733, %v821
          %v828 = vsub.f32 %v738, %v821
          %v829 = vsub.f32 %v743, %v821
          %v830 = vsub.f32 %v748, %v821
          %v831 = vsub.f32 %v753, %v821
          %v832 = vsub.f32 %v758, %v821
          %v833 = vsub.f32 %v763, %v821
          %v834 = vsub.f32 %v768, %v821
          %v835 = vsub.f32 %v773, %v821
          %v836 = vsub.f32 %v778, %v821
          %v837 = vsub.f32 %v783, %v821
          %v838 = vsub.f32 %v788, %v821
          %v839 = vmul.f32 %v823, 1.442695
          %v840 = vpow.pop %v839
          %v841 = vmul.f32 %v824, 1.442695
          %v842 = vpow.pop %v841
          %v843 = vmul.f32 %v825, 1.442695
          %v844 = vpow.pop %v843
          %v845 = vmul.f32 %v826, 1.442695
          %v846 = vpow.pop %v845
          %v847 = vmul.f32 %v827, 1.442695
          %v848 = vpow.pop %v847
          %v849 = vmul.f32 %v828, 1.442695
          %v850 = vpow.pop %v849
          %v851 = vmul.f32 %v829, 1.442695
          %v852 = vpow.pop %v851
          %v853 = vmul.f32 %v830, 1.442695
          %v854 = vpow.pop %v853
          %v855 = vmul.f32 %v831, 1.442695
          %v856 = vpow.pop %v855
          %v857 = vmul.f32 %v832, 1.442695
          %v858 = vpow.pop %v857
          %v859 = vmul.f32 %v833, 1.442695
          %v860 = vpow.pop %v859
          %v861 = vmul.f32 %v834, 1.442695
          %v862 = vpow.pop %v861
          %v863 = vmul.f32 %v835, 1.442695
          %v864 = vpow.pop %v863
          %v865 = vmul.f32 %v836, 1.442695
          %v866 = vpow.pop %v865
          %v867 = vmul.f32 %v837, 1.442695
          %v868 = vpow.pop %v867
          %v869 = vmul.f32 %v838, 1.442695
          %v870 = vpow.pop %v869
          %v871 = vld [vmem:[#allocation3] sm:$0x1]
          %v872 = vmul.f32 %v816, %v871
          %v873 = vadd.f32 %v840, %v842
          %v874 = vadd.f32 %v873, %v844
          %v875 = vadd.f32 %v874, %v846
          %v876 = vadd.f32 %v875, %v848
          %v877 = vadd.f32 %v876, %v850
          %v878 = vadd.f32 %v877, %v852
          %v879 = vadd.f32 %v878, %v854
          %v880 = vadd.f32 %v879, %v856
          %v881 = vadd.f32 %v880, %v858
          %v882 = vadd.f32 %v881, %v860
          %v883 = vadd.f32 %v882, %v862
          %v884 = vadd.f32 %v883, %v864
          %v885 = vadd.f32 %v884, %v866
          %v886 = vadd.f32 %v885, %v868
          %v887 = vadd.f32 %v886, %v870
          %v888 = vrot.slane %v887, 4
          %v889 = vadd.f32 %v887, %v888
          %v890 = vrot.slane %v889, 2
          %v891 = vadd.f32 %v889, %v890
          %v892 = vrot.slane %v891, 1
          %v893 = vadd.f32 %v891, %v892
          %v894 = vadd.f32 %v872, %v893
          %895 = vst [vmem:[#allocation3] sm:$0x1] %v894
          %v896 = vld [vmem:[#allocation4] sm:$0xff]
          %v897 = vld [vmem:[#allocation4 + $0x8] sm:$0xff]
          %v898 = vld [vmem:[#allocation4 + $0x10] sm:$0xff]
          %v899 = vld [vmem:[#allocation4 + $0x18] sm:$0xff]
          %v901 = vlaneseq
          %v902 = vshrl.u32 %v901, 7
          %v903 = vsub.s32 0, %v902
          %v904 = vrot.slane %v816, %v903
          %v906 = vmul.f32 %v904, %v896
          %v907 = vmul.f32 %v904, %v897
          %v908 = vmul.f32 %v904, %v898
          %v909 = vmul.f32 %v904, %v899
          %910 = vmatprep.subr.mxu0 0.0
          %911 = vmatpush1.msra.mxu0 %v870
          %912 = vmatprep.subr.mxu0 0.0
          %913 = vmatpush1.msra.mxu0 %v868
          %914 = vmatprep.subr.mxu0 0.0
          %915 = vmatpush1.msra.mxu0 %v866
          %916 = vmatprep.subr.mxu0 0.0
          %917 = vmatpush1.msra.mxu0 %v864
          %918 = vmatprep.subr.mxu0 0.0
          %919 = vmatpush1.msra.mxu0 %v862
          %920 = vmatprep.subr.mxu0 0.0
          %921 = vmatpush1.msra.mxu0 %v860
          %922 = vmatprep.subr.mxu0 0.0
          %923 = vmatpush1.msra.mxu0 %v858
          %924 = vmatprep.subr.mxu0 0.0
          %925 = vmatpush1.msra.mxu0 %v856
          %926 = vmatprep.subr.mxu0 0.0
          %927 = vmatpush1.msra.mxu0 %v854
          %928 = vmatprep.subr.mxu0 0.0
          %929 = vmatpush1.msra.mxu0 %v852
          %930 = vmatprep.subr.mxu0 0.0
          %931 = vmatpush1.msra.mxu0 %v850
          %932 = vmatprep.subr.mxu0 0.0
          %933 = vmatpush1.msra.mxu0 %v848
          %934 = vmatprep.subr.mxu0 0.0
          %935 = vmatpush1.msra.mxu0 %v846
          %936 = vmatprep.subr.mxu0 0.0
          %937 = vmatpush1.msra.mxu0 %v844
          %938 = vmatprep.subr.mxu0 0.0
          %939 = vmatpush1.msra.mxu0 %v842
          %940 = vmatprep.subr.mxu0 0.0
          %941 = vmatpush1.msra.mxu0 %v840
          %942 = vmatprep.subr.mxu0 0.0
          %943 = vmatpush2.msra.mxu0 0.0
          %944 = vmatprep.subr.mxu0 0.0
          %945 = vmatpush2.msra.mxu0 0.0
          %946 = vmatprep.subr.mxu0 0.0
          %947 = vmatpush2.msra.mxu0 0.0
          %948 = vmatprep.subr.mxu0 0.0
          %949 = vmatpush2.msra.mxu0 0.0
          %950 = vmatprep.subr.mxu0 0.0
          %951 = vmatpush2.msra.mxu0 0.0
          %952 = vmatprep.subr.mxu0 0.0
          %953 = vmatpush2.msra.mxu0 0.0
          %954 = vmatprep.subr.mxu0 0.0
          %955 = vmatpush2.msra.mxu0 0.0
          %956 = vmatprep.subr.mxu0 0.0
          %957 = vmatpush2.msra.mxu0 0.0
          %958 = vmatprep.subr.mxu0 0.0
          %959 = vmatpush2.msra.mxu0 0.0
          %960 = vmatprep.subr.mxu0 0.0
          %961 = vmatpush2.msra.mxu0 0.0
          %962 = vmatprep.subr.mxu0 0.0
          %963 = vmatpush2.msra.mxu0 0.0
          %964 = vmatprep.subr.mxu0 0.0
          %965 = vmatpush2.msra.mxu0 0.0
          %966 = vmatprep.subr.mxu0 0.0
          %967 = vmatpush2.msra.mxu0 0.0
          %968 = vmatprep.subr.mxu0 0.0
          %969 = vmatpush2.msra.mxu0 0.0
          %970 = vmatprep.subr.mxu0 0.0
          %971 = vmatpush2.msra.mxu0 0.0
          %972 = vmatprep.subr.mxu0 0.0
          %973 = vmatpush2.msra.mxu0 0.0
          %974 = vmatprep.mubr.f32.mxu0 0.0
          %975 = vmatmul.mubr.f32.gmra.mxu0 %v548
          %v976 = vpop.f32.mrf.mxu0
          %v977 = vadd.f32 0.0, %v976
          %v978 = vpop.f32.mrf.mxu0
          %979 = vmatprep.mubr.f32.mxu0 0.0
          %980 = vmatmul.mubr.f32.gmra.mxu0 %v553
          %v981 = vpop.f32.mrf.mxu0
          %v982 = vadd.f32 0.0, %v981
          %v983 = vpop.f32.mrf.mxu0
          %984 = vmatprep.mubr.f32.mxu0 0.0
          %985 = vmatmul.mubr.f32.gmra.mxu0 %v558
          %v986 = vpop.f32.mrf.mxu0
          %v987 = vadd.f32 0.0, %v986
          %v988 = vpop.f32.mrf.mxu0
          %989 = vmatprep.mubr.f32.mxu0 0.0
          %990 = vmatmul.mubr.f32.gmra.mxu0 %v563
          %v991 = vpop.f32.mrf.mxu0
          %v992 = vadd.f32 0.0, %v991
          %v993 = vpop.f32.mrf.mxu0
          %994 = vdwg.mxu0
          %v995 = vadd.f32 %v906, %v977
          %v996 = vadd.f32 %v907, %v982
          %v997 = vadd.f32 %v908, %v987
          %v998 = vadd.f32 %v909, %v992
          %999 = vst [vmem:[#allocation4] sm:$0xff] %v995
          %1000 = vst [vmem:[#allocation4 + $0x8] sm:$0xff] %v996
          %1001 = vst [vmem:[#allocation4 + $0x10] sm:$0xff] %v997
          %1002 = vst [vmem:[#allocation4 + $0x18] sm:$0xff] %v998
          %1003 = vst [vmem:[#allocation2] sm:$0x1] %v813
        $region53: #{tpu_custom_call.1} parent=43 // loop_footer
          %s439 = sadd.s32 1, %s435
        $region54: #{tpu_custom_call.1} parent=43 // loop_footer_branch
          %434 = sbr.rel target = $region50
        $region55: #{tpu_custom_call.1} parent=43 // loop_exit
          _
        %v1004 = vld [vmem:[#allocation3] sm:$0x1]
        %v1005 = vrcp.pop %v1004
        %v1006 = vmul.f32 1.0, %v1005
        %s1007 = sld [smem:[#allocation5]]
        %v1008 = vld [vmem:[#allocation4] sm:$0xff]
        %v1009 = vld [vmem:[#allocation4 + $0x8] sm:$0xff]
        %v1010 = vld [vmem:[#allocation4 + $0x10] sm:$0xff]
        %v1011 = vld [vmem:[#allocation4 + $0x18] sm:$0xff]
        %v1013 = vlaneseq
        %v1014 = vshrl.u32 %v1013, 7
        %v1015 = vsub.s32 0, %v1014
        %v1016 = vrot.slane %v1006, %v1015
        %v1018 = vmul.f32 %v1008, %v1016
        %v1019 = vmul.f32 %v1009, %v1016
        %v1020 = vmul.f32 %v1010, %v1016
        %v1021 = vmul.f32 %v1011, %v1016
        %v1022 = vstv %s1007
        %v1023 = vmul.f32 %v1022, %v1018
        %v1024 = vmul.f32 %v1022, %v1019
        %v1025 = vmul.f32 %v1022, %v1020
        %v1026 = vmul.f32 %v1022, %v1021
        %v1027 = vadd.f32 %v1023, %v290
        %v1028 = vadd.f32 %v1024, %v291
        %v1029 = vadd.f32 %v1025, %v292
        %v1030 = vadd.f32 %v1026, %v293
        %1031 = vst [vmem:[%s284] sm:$0xff] %v1027
        %1032 = vst [vmem:[%s284 + $0x8] sm:$0xff] %v1028
        %1033 = vst [vmem:[%s284 + $0x10] sm:$0xff] %v1029
        %1034 = vst [vmem:[%s284 + $0x18] sm:$0xff] %v1030
        %s1035 = sand.u32 %s177, 1
        %s1036 = scalar_lea.sflag [#allocation8], %s1035
        %s1037 = sand.u32 %s177, 1
        %s1038 = smul.addr %s1037, 32
        %s1039 = scalar_lea.vmem [#allocation9], %s1038
        // Predicated region
        $region56: #{tpu_custom_call.1} parent=43 // pred_check
          %p1040 = pneg %p187
        $region57: #{tpu_custom_call.1} parent=43 // pred_check_branch
          %1042 = sbr.rel (%p1040) target = $region59
        $region58: #{tpu_custom_call.1} parent=43 // pred_region
          %s1044 = ssub.s32 512, 512
          %1045 = vsyncadd %s1036, %s1044
          %s1046 = smul.addr %s28, 8
          %s1047 = sadd.s32 %s29, %s1046
          %s1048 = smul.addr %s1047, 128
          %s1049 = scalar_lea.hbm %s6, %s1048
          %s1050 = sshll.u32 %s1039, 4
          %s1051 = int_to_ptr.vmem [resolvable:$true] %s1050
          %1056 = dma.vmem_to_hbm [thread:$0]  %s1051, 512, %s1049, %s1036, 128, 256, 8
        $region59: #{tpu_custom_call.1} parent=43 // pred_fallthru
          _
      $region44: #{tpu_custom_call.1} parent=5 // pred_fallthru
        _
      %p1057 = scmp.le.s32.totalorder 2, %s19
      // Predicated region
      $region60: #{tpu_custom_call.1} parent=5 // pred_check
        %p1058 = pneg %p1057
      $region61: #{tpu_custom_call.1} parent=5 // pred_check_branch
        %1060 = sbr.rel (%p1058) target = $region63
      $region62: #{tpu_custom_call.1} parent=5 // pred_region
        %s1061 = ssub.s32 %s19, 2
        // Predicated region
        $region64: #{tpu_custom_call.1} parent=62 // pred_check
          %p1062 = pneg %p193
        $region65: #{tpu_custom_call.1} parent=62 // pred_check_branch
          %1064 = sbr.rel (%p1062) target = $region67
        $region66: #{tpu_custom_call.1} parent=62 // pred_region
          %s1065 = sand.u32 %s178, 1
          %s1066 = scalar_lea.sflag [#allocation8], %s1065
          %s1067 = sand.u32 %s178, 1
          %s1068 = smul.addr %s1067, 32
          %s1069 = scalar_lea.vmem [#allocation9], %s1068
          %1070 = dma.done %s1066, 512
        $region67: #{tpu_custom_call.1} parent=62 // pred_fallthru
          _
      $region63: #{tpu_custom_call.1} parent=5 // pred_fallthru
        _
    $region6: #{tpu_custom_call.1} parent=1 // loop_footer
      %s23 = sadd.s32 1, %s19
    $region7: #{tpu_custom_call.1} parent=1 // loop_footer_branch
      %18 = sbr.rel target = $region3
    $region8: #{tpu_custom_call.1} parent=1 // loop_exit
      _
    %1071 = vsyncpa [#allocation7], 1
    %s1072 = scalar_lea.sflag [#allocation7], 1
    %1073 = vsyncpa %s1072, 1
    %1074 = vsyncpa [#allocation8], 1
    %s1075 = scalar_lea.sflag [#allocation8], 1
    %1076 = vsyncpa %s1075, 1

</llo_original>
